<compile_context>
chip_gen: v5e
topology: v5e:2x2
jax: 0.10.0
libtpu: 0.0.40
codegen_flags: <defaults>
</compile_context>

<pallas_src>
import jax
import jax.numpy as jnp
from jax.experimental import pallas as pl
from jax.experimental.pallas import tpu as pltpu


def _proj_kernel(x_ref, w_ref, b_ref, o_ref):
    # x_ref: (Nb, C_in, TL)   input pixels, spatial on lanes
    # w_ref: (C_out, C_in)    projection weights (tiny, constant block index)
    # b_ref: (C_out, 1)       bias
    # o_ref: (Nb, C_out, TL)  output pixels, spatial on lanes
    x = x_ref[...].astype(jnp.float32)
    w = w_ref[...].astype(jnp.float32)
    b = b_ref[...].astype(jnp.float32)
    c_in = x.shape[1]

    # Bias folded into the first term; C_in = 3 so this unrolls at trace time.
    # TODO(synk): on v7x a stride-0 sublane-broadcast load of each input row
    # could shave the XLU broadcasts, but the plain form stays on the HBM
    # roofline (6 VALU ops per output vreg) and is portable.
    out = w[None, :, 0:1] * x[:, 0:1, :] + b[None, :, :]
    for c in range(1, c_in):
        out = out + w[None, :, c:c + 1] * x[:, c:c + 1, :]

    # Single dense, lane-wide store (masked only on the ragged boundary block).
    o_ref[...] = out.astype(o_ref.dtype)


def _ceil_div(a, b):
    return -(-a // b)


def _plan_tiles(n, hw, *, lane_budget=65536, min_steps=4, min_lanes_per_step=2048):
    """Pick (TL, Nb): lane tile size and images packed per grid step.

    Targets ~44*lane_budget bytes (~2.75 MB) of HBM traffic and ~8 MiB of
    double-buffered VMEM per step (safe for v5e/v6e/v7x scoped limits), then
    splits into >= min_steps steps when there is enough work so v7x's two
    TensorCores both stay busy — without shattering tiny problems."""
    if hw >= lane_budget:
        tl, nb = lane_budget, 1                        # multiple of 128
    else:
        tl = hw                                        # block == full dim (always legal)
        nb = min(n, max(1, lane_budget // max(hw, 1)))  # pack images into the lane budget
        while n % nb:                                  # keep Nb a divisor of N
            nb -= 1

    def steps(tl_, nb_):
        return (n // nb_) * _ceil_div(hw, tl_)

    while steps(tl, nb) < min_steps and nb * tl >= 2 * min_lanes_per_step:
        if nb > 1:
            nb //= 2
            while n % nb:
                nb -= 1
        else:
            tl = max(128, ((tl // 2) // 128) * 128)    # keep a 128-multiple tile
    return tl, nb


def channel_projector(x_nchw, weight, bias, *, lane_budget=65536):
    """1x1 Conv2d forward (PyTorch semantics), NCHW in / NCHW out.

    x_nchw : (N, C_in, H, W)
    weight : (C_out, C_in, 1, 1)  (PyTorch Conv2d layout)
    bias   : (C_out,)
    returns: (N, C_out, H, W), same dtype as x
    """
    N, C_in, H, W = x_nchw.shape
    C_out = weight.shape[0]
    HW = H * W

    # Free views on contiguous NCHW: no transpose, no data movement.
    x3 = x_nchw.reshape(N, C_in, HW)
    w_mat = weight.reshape(C_out, C_in)
    b_mat = bias.reshape(C_out, 1)

    TL, Nb = _plan_tiles(N, HW, lane_budget=lane_budget)
    grid = (N // Nb, _ceil_div(HW, TL))   # ragged last lane-block handled by Pallas masking

    out3 = pl.pallas_call(
        _proj_kernel,
        out_shape=jax.ShapeDtypeStruct((N, C_out, HW), x_nchw.dtype),
        grid_spec=pltpu.PrefetchScalarGridSpec(
            num_scalar_prefetch=0,
            grid=grid,
            in_specs=[
                # Nb images x full C_in x TL lanes per step.
                pl.BlockSpec((Nb, C_in, TL), lambda n, j: (n, 0, j)),
                # Tiny constant blocks: weights + bias (DMA'd once, index never changes).
                pl.BlockSpec((C_out, C_in), lambda n, j: (0, 0)),
                pl.BlockSpec((C_out, 1), lambda n, j: (0, 0)),
            ],
            out_specs=pl.BlockSpec((Nb, C_out, TL), lambda n, j: (n, 0, j)),
        ),
        compiler_params=pltpu.CompilerParams(
            dimension_semantics=("parallel", "parallel"),
            vmem_limit_bytes=32 * 1024 * 1024),
    )(x3, w_mat, b_mat)

    return out3.reshape(N, C_out, H, W)


if __name__ == "__main__":
    key = jax.random.PRNGKey(0)
    k_x, k_w, k_b = jax.random.split(key, 3)

    # Small shapes consistent with the module: batch=2, in_channels=3, spatial=16x16.
    N, C_in, H, W = 2, 3, 16, 16
    C_out = 8

    x = jax.random.normal(k_x, (N, C_in, H, W), dtype=jnp.float32)
    # Deterministic synthetic parameters mirroring Conv2d(3, 8, kernel_size=1) shapes.
    weight = jax.random.normal(k_w, (C_out, C_in, 1, 1), dtype=jnp.float32) * 0.1
    bias = jax.random.normal(k_b, (C_out,), dtype=jnp.float32) * 0.1

    out = channel_projector(x, weight, bias)
    out = jax.block_until_ready(out)

    # Reference: plain-JAX 1x1 conv semantics (NCHW).
    ref = jnp.einsum("nchw,oc->nohw", x, weight.reshape(C_out, C_in)) \
        + bias[None, :, None, None]
    assert out.shape == (N, C_out, H, W), out.shape
    assert jnp.allclose(out, ref, atol=1e-5, rtol=1e-5), float(jnp.max(jnp.abs(out - ref)))

    print("KERNEL_OK")
</pallas_src>

<mosaic_0001>
module attributes {stable_mosaic.version = 11 : i64} {
  func.func @_proj_kernel(%arg0: i32, %arg1: i32, %arg2: memref<2x3x256xf32, #tpu.memory_space<vmem>>, %arg3: memref<8x3xf32, #tpu.memory_space<vmem>>, %arg4: memref<8x1xf32, #tpu.memory_space<vmem>>, %arg5: memref<2x8x256xf32, #tpu.memory_space<vmem>>) attributes {dimension_semantics = [#tpu.dimension_semantics<parallel>, #tpu.dimension_semantics<parallel>], iteration_bounds = array<i64: 1, 1>, scalar_prefetch = 0 : i64, scratch_operands = 0 : i64, tpu.core_type = #tpu.core_type<tc>, window_params = [{transform_indices = @transform_0, window_bounds = array<i64: 2, 3, 256>}, {pipeline_mode = #tpu.pipeline_mode<synchronous>, transform_indices = @transform_1, window_bounds = array<i64: 8, 3>}, {pipeline_mode = #tpu.pipeline_mode<synchronous>, transform_indices = @transform_2, window_bounds = array<i64: 8, 1>}, {transform_indices = @transform_3, window_bounds = array<i64: 2, 8, 256>}]} {
    %c0 = arith.constant 0 : index
    %c0_0 = arith.constant 0 : index
    %c0_1 = arith.constant 0 : index
    %0 = vector.load %arg2[%c0, %c0_0, %c0_1] : memref<2x3x256xf32, #tpu.memory_space<vmem>>, vector<2x3x256xf32>
    %c0_2 = arith.constant 0 : index
    %c0_3 = arith.constant 0 : index
    %1 = vector.load %arg3[%c0_2, %c0_3] : memref<8x3xf32, #tpu.memory_space<vmem>>, vector<8x3xf32>
    %c0_4 = arith.constant 0 : index
    %c0_5 = arith.constant 0 : index
    %2 = vector.load %arg4[%c0_4, %c0_5] : memref<8x1xf32, #tpu.memory_space<vmem>>, vector<8x1xf32>
    %3 = vector.extract_strided_slice %1 {offsets = [0, 0], sizes = [8, 1], strides = [1, 1]} : vector<8x3xf32> to vector<8x1xf32>
    %4 = vector.shape_cast %3 : vector<8x1xf32> to vector<1x8x1xf32>
    %5 = vector.extract_strided_slice %0 {offsets = [0, 0, 0], sizes = [2, 1, 256], strides = [1, 1, 1]} : vector<2x3x256xf32> to vector<2x1x256xf32>
    %6 = vector.broadcast %4 : vector<1x8x1xf32> to vector<2x8x256xf32>
    %7 = vector.broadcast %5 : vector<2x1x256xf32> to vector<2x8x256xf32>
    %8 = arith.mulf %6, %7 : vector<2x8x256xf32>
    %9 = vector.shape_cast %2 : vector<8x1xf32> to vector<1x8x1xf32>
    %10 = vector.broadcast %9 : vector<1x8x1xf32> to vector<2x8x256xf32>
    %11 = arith.addf %8, %10 : vector<2x8x256xf32>
    %12 = vector.extract_strided_slice %1 {offsets = [0, 1], sizes = [8, 1], strides = [1, 1]} : vector<8x3xf32> to vector<8x1xf32>
    %13 = vector.shape_cast %12 : vector<8x1xf32> to vector<1x8x1xf32>
    %14 = vector.extract_strided_slice %0 {offsets = [0, 1, 0], sizes = [2, 1, 256], strides = [1, 1, 1]} : vector<2x3x256xf32> to vector<2x1x256xf32>
    %15 = vector.broadcast %13 : vector<1x8x1xf32> to vector<2x8x256xf32>
    %16 = vector.broadcast %14 : vector<2x1x256xf32> to vector<2x8x256xf32>
    %17 = arith.mulf %15, %16 : vector<2x8x256xf32>
    %18 = arith.addf %11, %17 : vector<2x8x256xf32>
    %19 = vector.extract_strided_slice %1 {offsets = [0, 2], sizes = [8, 1], strides = [1, 1]} : vector<8x3xf32> to vector<8x1xf32>
    %20 = vector.shape_cast %19 : vector<8x1xf32> to vector<1x8x1xf32>
    %21 = vector.extract_strided_slice %0 {offsets = [0, 2, 0], sizes = [2, 1, 256], strides = [1, 1, 1]} : vector<2x3x256xf32> to vector<2x1x256xf32>
    %22 = vector.broadcast %20 : vector<1x8x1xf32> to vector<2x8x256xf32>
    %23 = vector.broadcast %21 : vector<2x1x256xf32> to vector<2x8x256xf32>
    %24 = arith.mulf %22, %23 : vector<2x8x256xf32>
    %25 = arith.addf %18, %24 : vector<2x8x256xf32>
    %c0_6 = arith.constant 0 : index
    %c0_7 = arith.constant 0 : index
    %c0_8 = arith.constant 0 : index
    %26 = vector.load %arg5[%c0_6, %c0_7, %c0_8] : memref<2x8x256xf32, #tpu.memory_space<vmem>>, vector<2x8x256xf32>
    tpu.vector_store %arg5[%c0_6, %c0_7, %c0_8], %25 {strides = array<i32>} : memref<2x8x256xf32, #tpu.memory_space<vmem>>, vector<2x8x256xf32>,
    return
  }
  func.func @transform_0(%arg0: i32, %arg1: i32) -> (i32, i32, i32) {
    %c0_i32 = arith.constant 0 : i32
    %c0_i32_0 = arith.constant 0 : i32
    return %arg0, %c0_i32, %arg1 : i32, i32, i32
  }
  func.func @transform_1(%arg0: i32, %arg1: i32) -> (i32, i32) {
    %c0_i32 = arith.constant 0 : i32
    %c0_i32_0 = arith.constant 0 : i32
    %c0_i32_1 = arith.constant 0 : i32
    return %c0_i32, %c0_i32_0 : i32, i32
  }
  func.func @transform_2(%arg0: i32, %arg1: i32) -> (i32, i32) {
    %c0_i32 = arith.constant 0 : i32
    %c0_i32_0 = arith.constant 0 : i32
    %c0_i32_1 = arith.constant 0 : i32
    return %c0_i32, %c0_i32_0 : i32, i32
  }
  func.func @transform_3(%arg0: i32, %arg1: i32) -> (i32, i32, i32) {
    %c0_i32 = arith.constant 0 : i32
    %c0_i32_0 = arith.constant 0 : i32
    return %arg0, %c0_i32, %arg1 : i32, i32, i32
  }
}

</mosaic_0001>

<llo_original>
// kernel: tpu_custom_call.1
$region0: #{tpu_custom_call.1}
  #allocation0 [shape = 'u32[]', space=smem, size = 0x4, offset = 0x4, fixed_abs, tag = 'smem constant byte address 0x4 - core index']
  #allocation1 [shape = 'u32[72,128]{1,0:T(1,128)}', space=vmem, size = 0x9000, scoped, tag = 'internal scratch']
  %s0 = inlined_call_operand.vmem [shape: f32[2,3,256], index: 0, kind: input, shape index: {}]
  %s1 = inlined_call_operand.vmem [shape: f32[8,3], index: 1, kind: input, shape index: {}]
  %s2 = inlined_call_operand.vmem [shape: f32[8,1], index: 2, kind: input, shape index: {}]
  %s3 = inlined_call_operand.hbm [shape: f32[2,8,256], index: 3, kind: output, shape index: {}]
  %s4 = sld [smem:[#allocation0]]
  $region22: #{tpu_custom_call.1} parent=0
    _
  %s6 = ssub.s32 1, %s4
  %s7 = scalar_select 0, %s6, %s4
  $region1: #{tpu_custom_call.1} parent=0
    #allocation2 [shape = 'u8[16384]{0}', space=vmem, size = 0x4000, scoped, tag = 'output window, operand 0, single buffered']
    #allocation3 [shape = 's32[1]{0}', space=sflag, size = 0x4, scoped, tag = 'scoped memory for tpu_custom_call.1']
    %8 = vsyncpa [#allocation3], 0
    // Predicated region
    $region2: #{tpu_custom_call.1} parent=1 // pred_check
      _
    $region3: #{tpu_custom_call.1} parent=1 // pred_check_branch
      %10 = sbr.rel (0) target = $region5
    $region4: #{tpu_custom_call.1} parent=1 // pred_region
      _
    $region5: #{tpu_custom_call.1} parent=1 // pred_fallthru
      _
    // Predicated region
    $region6: #{tpu_custom_call.1} parent=1 // pred_check
      _
    $region7: #{tpu_custom_call.1} parent=1 // pred_check_branch
      %12 = sbr.rel (0) target = $region9
    $region8: #{tpu_custom_call.1} parent=1 // pred_region
      _
    $region9: #{tpu_custom_call.1} parent=1 // pred_fallthru
      _
    // Predicated region
    $region10: #{tpu_custom_call.1} parent=1 // pred_check
      _
    $region11: #{tpu_custom_call.1} parent=1 // pred_check_branch
      %14 = sbr.rel (0) target = $region13
    $region12: #{tpu_custom_call.1} parent=1 // pred_region
      _
    $region13: #{tpu_custom_call.1} parent=1 // pred_fallthru
      _
    %v15 = vld [vmem:[%s0] sm:$0x77]
    %v16 = vld [vmem:[%s0 + $0x8] sm:$0x77]
    %v17 = vld [vmem:[%s1] sm:$0xff]
    %v18 = vld [vmem:[%s2] sm:$0xff]
    %20 = vset.pattern.permute.xlu0 0
    %21 = vperm.xlu0 %20, %v17
    %v22 = vpop.permute.xlu0 %21
    %v26 = vperm.slane %v15, 0
    %v27 = vperm.slane %v15, 4
    %v28 = vperm.slane %v16, 0
    %v29 = vperm.slane %v16, 4
    %v34 = vperm.slane %v26, 0
    %v35 = vperm.slane %v27, 0
    %v36 = vperm.slane %v28, 0
    %v37 = vperm.slane %v29, 0
    %v38 = vmul.f32 %v22, %v34
    %v39 = vmul.f32 %v22, %v35
    %v40 = vmul.f32 %v22, %v36
    %v41 = vmul.f32 %v22, %v37
    %43 = vset.pattern.permute.xlu0 0
    %44 = vperm.xlu0 %43, %v18
    %v45 = vpop.permute.xlu0 %44
    %v47 = vadd.f32 %v38, %v45
    %v48 = vadd.f32 %v39, %v45
    %v49 = vadd.f32 %v40, %v45
    %v50 = vadd.f32 %v41, %v45
    %51 = vset.pattern.permute.xlu0 1
    %52 = vperm.xlu0 %51, %v17
    %v53 = vpop.permute.xlu0 %52
    %v55 = vperm.slane %v15, 1
    %v56 = vperm.slane %v15, 5
    %v57 = vperm.slane %v16, 1
    %v58 = vperm.slane %v16, 5
    %v63 = vperm.slane %v55, 1
    %v64 = vperm.slane %v56, 1
    %v65 = vperm.slane %v57, 1
    %v66 = vperm.slane %v58, 1
    %v67 = vmul.f32 %v53, %v63
    %v68 = vmul.f32 %v53, %v64
    %v69 = vmul.f32 %v53, %v65
    %v70 = vmul.f32 %v53, %v66
    %v71 = vadd.f32 %v47, %v67
    %v72 = vadd.f32 %v48, %v68
    %v73 = vadd.f32 %v49, %v69
    %v74 = vadd.f32 %v50, %v70
    %75 = vset.pattern.permute.xlu0 2
    %76 = vperm.xlu0 %75, %v17
    %v77 = vpop.permute.xlu0 %76
    %v79 = vperm.slane %v15, 2
    %v80 = vperm.slane %v15, 6
    %v81 = vperm.slane %v16, 2
    %v82 = vperm.slane %v16, 6
    %v87 = vperm.slane %v79, 2
    %v88 = vperm.slane %v80, 2
    %v89 = vperm.slane %v81, 2
    %v90 = vperm.slane %v82, 2
    %v91 = vmul.f32 %v77, %v87
    %v92 = vmul.f32 %v77, %v88
    %v93 = vmul.f32 %v77, %v89
    %v94 = vmul.f32 %v77, %v90
    %v95 = vadd.f32 %v71, %v91
    %v96 = vadd.f32 %v72, %v92
    %v97 = vadd.f32 %v73, %v93
    %v98 = vadd.f32 %v74, %v94
    %99 = vst [vmem:[#allocation2] sm:$0xff] %v95
    %100 = vst [vmem:[#allocation2 + $0x8] sm:$0xff] %v96
    %101 = vst [vmem:[#allocation2 + $0x10] sm:$0xff] %v97
    %102 = vst [vmem:[#allocation2 + $0x18] sm:$0xff] %v98
    // Predicated region
    $region14: #{tpu_custom_call.1} parent=1 // pred_check
      _
    $region15: #{tpu_custom_call.1} parent=1 // pred_check_branch
      %104 = sbr.rel (0) target = $region17
    $region16: #{tpu_custom_call.1} parent=1 // pred_region
      %106 = vsyncadd [#allocation3], 0
      %s107 = sshll.u32 [#allocation2], 4
      %s108 = int_to_ptr.vmem [resolvable:$true] %s107
      %s109 = sshll.u32 %s3, 4
      %s110 = int_to_ptr.hbm [resolvable:$true] %s109
      %115 = dma.vmem_to_hbm [thread:$0]  %s108, 512, %s110, [#allocation3], 256, 256, 16
    $region17: #{tpu_custom_call.1} parent=1 // pred_fallthru
      _
    // Predicated region
    $region18: #{tpu_custom_call.1} parent=1 // pred_check
      _
    $region19: #{tpu_custom_call.1} parent=1 // pred_check_branch
      %117 = sbr.rel (0) target = $region21
    $region20: #{tpu_custom_call.1} parent=1 // pred_region
      %119 = dma.done [#allocation3], 512
    $region21: #{tpu_custom_call.1} parent=1 // pred_fallthru
      _
    %120 = vsyncpa [#allocation3], 1

</llo_original>
